<compile_context>
chip_gen: v5e
topology: v5e:2x2
jax: 0.10.0
libtpu: 0.0.40
codegen_flags: <defaults>
</compile_context>

<pallas_src>
import functools
import math

import jax
import jax.numpy as jnp
from jax.experimental import pallas as pl
from jax.experimental.pallas import tpu as pltpu


# --------------------------------------------------------------------------- utils
def _layernorm(v, g, b, eps=1e-5):
    mu = jnp.mean(v, axis=-1, keepdims=True)
    var = jnp.mean((v - mu) ** 2, axis=-1, keepdims=True)
    return (v - mu) * jax.lax.rsqrt(var + eps) * g + b


def _vmem_capacity_bytes():
    try:
        return int(pltpu.get_tpu_info().vmem_capacity_bytes)
    except Exception:
        return 64 * 1024 * 1024        # conservative default (v7x per-core VMEM)


def _bf16_eup_ok():
    """bf16 transcendentals are native on v6e/v7x; keep f32 exp elsewhere (v5e/v5p/v4)."""
    try:
        kind = jax.devices()[0].device_kind.lower()
        return any(t in kind for t in ("v6", "v7", "tpu7"))
    except Exception:
        return False


@functools.lru_cache(maxsize=None)
def _single_buffering_supported():
    """Probe whether BlockSpec(pipeline_mode=pl.Buffered(1)) compiles+runs here."""
    try:
        def _probe_kernel(x_ref, o_ref):
            o_ref[...] = x_ref[...] + 1.0

        spec = pl.BlockSpec((8, 128), lambda i: (0, 0), pipeline_mode=pl.Buffered(1))
        with jax.ensure_compile_time_eval():
            out = pl.pallas_call(
                _probe_kernel,
                out_shape=jax.ShapeDtypeStruct((8, 128), jnp.float32),
                grid=(1,),
                in_specs=[spec],
                out_specs=pl.BlockSpec((8, 128), lambda i: (0, 0)),
            )(jnp.ones((8, 128), jnp.float32))
            jax.block_until_ready(out)
        return True
    except Exception:
        return False


def _invariant_spec(block_shape, index_map):
    """Grid-invariant operand (constant index_map): single-buffer it if supported so
    weights are not pointlessly double-buffered (halves resident weight VMEM on v7x)."""
    if _single_buffering_supported():
        return pl.BlockSpec(block_shape, index_map, pipeline_mode=pl.Buffered(1))
    return pl.BlockSpec(block_shape, index_map)


def _pick_seq_tile(T, target):
    if T <= target:
        return T
    for c in range(target, 127, -128):      # prefer lane/MXU friendly multiples of 128
        if T % c == 0:
            return c
    for c in range(target, 7, -8):          # fallback: any multiple of 8 divisor
        if T % c == 0:                      # TODO(synk): pad+mask instead
            return c
    return T


def _pick_ff_chunk(F):
    if F <= 1024:
        return F
    for c in (2048, 1024, 512, 256, 128):
        if c <= F and F % c == 0:
            return c
    return F


# --------------------------------------------------------------- kernel 1: QKV proj
def _qkv_proj_kernel(x_ref, wqkv_ref, q_ref, k_ref, v_ref):
    E = x_ref.shape[-1]
    # One lane-dense (TR, E) @ (E, 3E) matmul (Q already scaled by 1/sqrt(E) via Wq).
    qkv = jnp.dot(x_ref[0], wqkv_ref[...], preferred_element_type=jnp.float32)
    q_ref[0] = qkv[:, :E].astype(q_ref.dtype)
    k_ref[0] = qkv[:, E:2 * E].astype(k_ref.dtype)
    v_ref[0] = qkv[:, 2 * E:].astype(v_ref.dtype)


def _qkv_projection(x, wqkv, TR, vmem_limit):
    B, T, E = x.shape
    sds = jax.ShapeDtypeStruct((B, T, E), x.dtype)
    itemsize = jnp.dtype(x.dtype).itemsize
    cost = pl.CostEstimate(
        flops=int(2 * B * T * E * 3 * E),
        transcendentals=0,
        bytes_accessed=int((4 * B * T * E + 3 * E * E) * itemsize))
    return pl.pallas_call(
        _qkv_proj_kernel,
        out_shape=(sds, sds, sds),
        grid_spec=pltpu.PrefetchScalarGridSpec(
            num_scalar_prefetch=0,
            grid=(B, T // TR),
            in_specs=[
                pl.BlockSpec((1, TR, E), lambda b, r: (b, r, 0)),
                _invariant_spec((E, 3 * E), lambda b, r: (0, 0)),
            ],
            out_specs=[pl.BlockSpec((1, TR, E), lambda b, r: (b, r, 0))] * 3,
        ),
        compiler_params=pltpu.CompilerParams(
            dimension_semantics=("parallel", "parallel"),
            vmem_limit_bytes=vmem_limit,
        ),
        cost_estimate=cost,
    )(x, wqkv)


# ------------------------------------------------------- kernel 2: attention + LN1
def _attn_ln1_kernel(q_ref, k_ref, v_ref, x_ref,
                     wu_ref, bu_ref, g1_ref, be1_ref,
                     o_ref,
                     m_scr, l_scr, acc_scr,
                     *, heads, exp_dtype):
    ki = pl.program_id(2)
    nkv = pl.num_programs(2)

    cdt = q_ref.dtype
    TQ, E = q_ref.shape[1], q_ref.shape[2]
    s = E // heads

    @pl.when(ki == 0)
    def _init():
        m_scr[...] = jnp.full(m_scr.shape, -jnp.inf, dtype=m_scr.dtype)
        l_scr[...] = jnp.zeros(l_scr.shape, dtype=l_scr.dtype)
        acc_scr[...] = jnp.zeros(acc_scr.shape, dtype=acc_scr.dtype)

    q = q_ref[0]        # (TQ, E)  — Q pre-scaled by 1/sqrt(E)
    k = k_ref[0]        # (TKV, E)
    v = v_ref[0]        # (TKV, E)

    # Online softmax per head; acc kept as lane slabs of a single (TQ, E) scratch.
    # NOTE: m/l stay lane-width-1; acceptable since VALU has slack (review minor item).
    for h in range(heads):                                   # static, unrolled
        sl = slice(h * s, (h + 1) * s)
        scores = jax.lax.dot_general(                        # (TQ, TKV), contract on s
            q[:, sl], k[:, sl], (((1,), (1,)), ((), ())),
            preferred_element_type=jnp.float32)
        m_prev = m_scr[h]                                    # (TQ, 1) f32
        m_new = jnp.maximum(m_prev, jnp.max(scores, axis=-1, keepdims=True))
        alpha = jnp.exp(m_prev - m_new)                      # f32 (tiny)
        p = jnp.exp((scores - m_new).astype(exp_dtype))      # bf16 EUP on v6e/v7x
        l_scr[h] = alpha * l_scr[h] + jnp.sum(
            p.astype(jnp.float32), axis=-1, keepdims=True)
        acc_scr[:, sl] = alpha * acc_scr[:, sl] + jnp.dot(
            p.astype(cdt), v[:, sl], preferred_element_type=jnp.float32)
        m_scr[h] = m_new

    @pl.when(ki == nkv - 1)
    def _finalize():
        # Per-head normalization in place, then a single (TQ,E)@(E,E) unify matmul.
        for h in range(heads):
            sl = slice(h * s, (h + 1) * s)
            acc_scr[:, sl] = acc_scr[:, sl] * pl.reciprocal(l_scr[h], approx=True)
        attended = jnp.dot(acc_scr[...].astype(cdt), wu_ref[...],
                           preferred_element_type=jnp.float32) + bu_ref[...]
        x1 = _layernorm(attended + x_ref[0].astype(jnp.float32),
                        g1_ref[...], be1_ref[...])
        # dropout = identity (eval mode)
        o_ref[0] = x1.astype(o_ref.dtype)


def _attention_ln1(x, q, k, v, wu, bu, g1, be1, *, heads, TQ, TKV, exp_dtype,
                   vmem_limit):
    B, T, E = x.shape
    itemsize = jnp.dtype(x.dtype).itemsize
    cost = pl.CostEstimate(
        flops=int(B * (4 * T * T * E + 2 * T * E * E)),
        transcendentals=int(B * heads * T * T),
        bytes_accessed=int((3 * B * T * E + 2 * B * T * E * (T // TQ) + E * E)
                           * itemsize))
    kernel = functools.partial(_attn_ln1_kernel, heads=heads, exp_dtype=exp_dtype)
    return pl.pallas_call(
        kernel,
        out_shape=jax.ShapeDtypeStruct((B, T, E), x.dtype),
        grid_spec=pltpu.PrefetchScalarGridSpec(
            num_scalar_prefetch=0,
            grid=(B, T // TQ, T // TKV),
            in_specs=[
                pl.BlockSpec((1, TQ, E), lambda b, qi, ki: (b, qi, 0)),   # Q
                pl.BlockSpec((1, TKV, E), lambda b, qi, ki: (b, ki, 0)),  # K
                pl.BlockSpec((1, TKV, E), lambda b, qi, ki: (b, ki, 0)),  # V
                pl.BlockSpec((1, TQ, E), lambda b, qi, ki: (b, qi, 0)),   # x residual
                _invariant_spec((E, E), lambda b, qi, ki: (0, 0)),        # Wu
                _invariant_spec((1, E), lambda b, qi, ki: (0, 0)),        # bu (f32)
                _invariant_spec((1, E), lambda b, qi, ki: (0, 0)),        # LN1 gamma
                _invariant_spec((1, E), lambda b, qi, ki: (0, 0)),        # LN1 beta
            ],
            out_specs=pl.BlockSpec((1, TQ, E), lambda b, qi, ki: (b, qi, 0)),
            scratch_shapes=[
                pltpu.VMEM((heads, TQ, 1), jnp.float32),   # running max
                pltpu.VMEM((heads, TQ, 1), jnp.float32),   # running denom
                pltpu.VMEM((TQ, E), jnp.float32),          # head lane-slab accumulator
            ],
        ),
        compiler_params=pltpu.CompilerParams(
            # For v7x megacore, keep B*(T//TQ) >= 2 so both TensorCores get work.
            dimension_semantics=("parallel", "parallel", "arbitrary"),
            vmem_limit_bytes=vmem_limit,
        ),
        cost_estimate=cost,
    )(q, k, v, x, wu, bu, g1, be1)


# ------------------------------------------------------------ kernel 3: FFN + LN2
def _ffn_ln2_kernel(x1_ref, w1_ref, b1_ref, w2_ref, b2_ref, g2_ref, be2_ref,
                    o_ref, acc_scr):
    fi = pl.program_id(2)
    nf = pl.num_programs(2)
    cdt = x1_ref.dtype

    @pl.when(fi == 0)
    def _init():
        acc_scr[...] = jnp.zeros(acc_scr.shape, dtype=acc_scr.dtype)

    x1 = x1_ref[0]                                                       # (TQ, E)
    hid = jnp.dot(x1, w1_ref[...], preferred_element_type=jnp.float32)   # (TQ, FC)
    hid = jnp.maximum(hid + b1_ref[...], 0.0)                            # bias + ReLU
    acc_scr[...] += jnp.dot(hid.astype(cdt), w2_ref[...],
                            preferred_element_type=jnp.float32)

    @pl.when(fi == nf - 1)
    def _finalize():
        ff = acc_scr[...] + b2_ref[...]
        x2 = _layernorm(ff + x1_ref[0].astype(jnp.float32),
                        g2_ref[...], be2_ref[...])
        # dropout = identity (eval mode)
        o_ref[0] = x2.astype(o_ref.dtype)


def _ffn_ln2(x1, w1, b1, w2, b2, g2, be2, *, TQ, FC, vmem_limit):
    B, T, E = x1.shape
    F = w1.shape[1]
    itemsize = jnp.dtype(x1.dtype).itemsize
    cost = pl.CostEstimate(
        flops=int(4 * B * T * E * F),
        transcendentals=int(B * T),
        bytes_accessed=int((2 * B * T * E + 2 * E * F * (B * T // TQ)) * itemsize))
    return pl.pallas_call(
        _ffn_ln2_kernel,
        out_shape=jax.ShapeDtypeStruct((B, T, E), x1.dtype),
        grid_spec=pltpu.PrefetchScalarGridSpec(
            num_scalar_prefetch=0,
            grid=(B, T // TQ, F // FC),
            in_specs=[
                pl.BlockSpec((1, TQ, E), lambda b, r, f: (b, r, 0)),   # x1
                pl.BlockSpec((E, FC), lambda b, r, f: (0, f)),         # w1 chunk (streamed)
                pl.BlockSpec((1, FC), lambda b, r, f: (0, f)),         # b1 chunk (f32)
                pl.BlockSpec((FC, E), lambda b, r, f: (f, 0)),         # w2 chunk (streamed)
                _invariant_spec((1, E), lambda b, r, f: (0, 0)),       # b2 (f32)
                _invariant_spec((1, E), lambda b, r, f: (0, 0)),       # LN2 gamma
                _invariant_spec((1, E), lambda b, r, f: (0, 0)),       # LN2 beta
            ],
            out_specs=pl.BlockSpec((1, TQ, E), lambda b, r, f: (b, r, 0)),
            scratch_shapes=[pltpu.VMEM((TQ, E), jnp.float32)],
        ),
        compiler_params=pltpu.CompilerParams(
            dimension_semantics=("parallel", "parallel", "arbitrary"),
            vmem_limit_bytes=vmem_limit,
        ),
        cost_estimate=cost,
    )(x1, w1, b1, w2, b2, g2, be2)


# -------------------------------------------------------------------- full block
def transformer_block(x, params, *, heads, q_tile=None, kv_tile=None, ff_chunk=None):
    B, T, E = x.shape
    assert E % heads == 0
    F = params["w1"].shape[1]
    dt = x.dtype
    f32 = jnp.float32

    # Matmul weights in the compute dtype (bf16 recommended). 1/sqrt(E) folded into Wq
    # (module scales by 1/sqrt(emb), not head_dim). Q/K/V fused into one (E, 3E) weight.
    scale = 1.0 / math.sqrt(E)
    wq = (jnp.asarray(params["wq"], f32) * scale).astype(dt)
    wk = jnp.asarray(params["wk"]).astype(dt)
    wv = jnp.asarray(params["wv"]).astype(dt)
    wqkv = jnp.concatenate([wq, wk, wv], axis=1)                 # (E, 3E)
    wu = jnp.asarray(params["wu"]).astype(dt)
    w1 = jnp.asarray(params["w1"]).astype(dt)
    w2 = jnp.asarray(params["w2"]).astype(dt)
    # Biases / LayerNorm params stay f32 (negligible VMEM, avoids avoidable rounding).
    bu = jnp.asarray(params["bu"], f32).reshape(1, E)
    b1 = jnp.asarray(params["b1"], f32).reshape(1, F)
    b2 = jnp.asarray(params["b2"], f32).reshape(1, E)
    g1 = jnp.asarray(params["g1"], f32).reshape(1, E)
    be1 = jnp.asarray(params["be1"], f32).reshape(1, E)
    g2 = jnp.asarray(params["g2"], f32).reshape(1, E)
    be2 = jnp.asarray(params["be2"], f32).reshape(1, E)

    # Generation-aware VMEM limit and default tile targets.
    vmem_cap = _vmem_capacity_bytes()
    vmem_limit = int(min(vmem_cap * 0.85, vmem_cap - 8 * 1024 * 1024))
    seq_target = 512 if vmem_cap >= 96 * 1024 * 1024 else 256    # v5e/v6e vs v7x

    TQ = q_tile or _pick_seq_tile(T, seq_target)
    TKV = kv_tile or _pick_seq_tile(T, seq_target)
    assert T % TQ == 0 and T % TKV == 0, "q/kv tiles must divide T"
    FC = ff_chunk or _pick_ff_chunk(F)
    assert F % FC == 0, "ff chunk must divide F"

    # bf16 exp only where the EUP is bf16-native (v6e/v7x); f32 elsewhere (v5e).
    exp_dtype = jnp.bfloat16 if (dt == jnp.bfloat16 and _bf16_eup_ok()) else f32

    q, k, v = _qkv_projection(x, wqkv, TQ, vmem_limit)
    x1 = _attention_ln1(x, q, k, v, wu, bu, g1, be1,
                        heads=heads, TQ=TQ, TKV=TKV,
                        exp_dtype=exp_dtype, vmem_limit=vmem_limit)
    return _ffn_ln2(x1, w1, b1, w2, b2, g2, be2,
                    TQ=TQ, FC=FC, vmem_limit=vmem_limit)


# ------------------------------------------------------------------- pure-JAX ref
def reference_block(x, p, *, heads):
    """Pure-JAX reference mirroring the PyTorch forward (eval-mode dropout)."""
    B, T, E = x.shape
    s = E // heads
    q = x @ p["wq"]
    k = x @ p["wk"]
    v = x @ p["wv"]
    q = q.reshape(B, T, heads, s).transpose(0, 2, 1, 3)
    k = k.reshape(B, T, heads, s).transpose(0, 2, 1, 3)
    v = v.reshape(B, T, heads, s).transpose(0, 2, 1, 3)
    dot = jnp.einsum("bhts,bhus->bhtu", q, k) / math.sqrt(E)
    dot = jax.nn.softmax(dot, axis=-1)
    out = jnp.einsum("bhtu,bhus->bhts", dot, v)
    out = out.transpose(0, 2, 1, 3).reshape(B, T, E)
    attended = out @ p["wu"] + p["bu"]

    def ln(v_, g, b):
        mu = jnp.mean(v_, -1, keepdims=True)
        var = jnp.mean((v_ - mu) ** 2, -1, keepdims=True)
        return (v_ - mu) / jnp.sqrt(var + 1e-5) * g + b

    x1 = ln(attended + x, p["g1"], p["be1"])
    ff = jax.nn.relu(x1 @ p["w1"] + p["b1"]) @ p["w2"] + p["b2"]
    return ln(ff + x1, p["g2"], p["be2"])


if __name__ == "__main__":
    E, HEADS = 64, 4
    FF = 4 * E

    key = jax.random.PRNGKey(0)
    keys = jax.random.split(key, 12)

    # Weights stored already transposed relative to PyTorch nn.Linear so math is `x @ W`.
    params = {
        "wq": jax.random.normal(keys[0], (E, E), jnp.float32) * 0.1,
        "wk": jax.random.normal(keys[1], (E, E), jnp.float32) * 0.1,
        "wv": jax.random.normal(keys[2], (E, E), jnp.float32) * 0.1,
        "wu": jax.random.normal(keys[3], (E, E), jnp.float32) * 0.1,
        "bu": jax.random.normal(keys[4], (1, E), jnp.float32) * 0.1,
        "w1": jax.random.normal(keys[5], (E, FF), jnp.float32) * 0.1,
        "b1": jax.random.normal(keys[6], (1, FF), jnp.float32) * 0.1,
        "w2": jax.random.normal(keys[7], (FF, E), jnp.float32) * 0.1,
        "b2": jax.random.normal(keys[8], (1, E), jnp.float32) * 0.1,
        "g1": jnp.ones((1, E), jnp.float32),
        "be1": jnp.zeros((1, E), jnp.float32),
        "g2": jnp.ones((1, E), jnp.float32),
        "be2": jnp.zeros((1, E), jnp.float32),
    }

    # Case 1: toy module shapes (B=2, T=8) — single q/kv tile, single FFN chunk.
    x1 = jax.random.normal(keys[9], (2, 8, E), jnp.float32)
    out1 = jax.block_until_ready(transformer_block(x1, params, heads=HEADS))
    ref1 = reference_block(x1, params, heads=HEADS)
    assert out1.shape == x1.shape
    assert jnp.allclose(out1, ref1, atol=2e-2, rtol=2e-3), "f32 single-tile mismatch"

    # Case 2: forces flash path (2 q-tiles x 4 kv-tiles) and FFN streaming (2 F chunks).
    x2 = jax.random.normal(keys[10], (2, 32, E), jnp.float32)
    out2 = jax.block_until_ready(
        transformer_block(x2, params, heads=HEADS, q_tile=16, kv_tile=8, ff_chunk=128))
    ref2 = reference_block(x2, params, heads=HEADS)
    assert jnp.allclose(out2, ref2, atol=2e-2, rtol=2e-3), "f32 tiled mismatch"

    # Case 3: bf16 inputs/weights (MXU-native path), f32 accumulation in-kernel.
    xb = x2.astype(jnp.bfloat16)
    pb = {k_: v_.astype(jnp.bfloat16) for k_, v_ in params.items()}
    out3 = jax.block_until_ready(
        transformer_block(xb, pb, heads=HEADS, q_tile=16, kv_tile=8, ff_chunk=128))
    assert jnp.allclose(out3.astype(jnp.float32), ref2, atol=3e-1, rtol=5e-2), \
        "bf16 mismatch"

    print("KERNEL_OK")
</pallas_src>

<mosaic_0001>
module attributes {stable_mosaic.version = 11 : i64} {
  func.func @_probe_kernel(%arg0: i32, %arg1: memref<8x128xf32, #tpu.memory_space<vmem>>, %arg2: memref<8x128xf32, #tpu.memory_space<vmem>>) attributes {dimension_semantics = [#tpu.dimension_semantics<arbitrary>], iteration_bounds = array<i64: 1>, scalar_prefetch = 0 : i64, scratch_operands = 0 : i64, tpu.core_type = #tpu.core_type<tc>, window_params = [{pipeline_mode = #tpu.pipeline_mode<synchronous>, transform_indices = @transform_0, window_bounds = array<i64: 8, 128>}, {pipeline_mode = #tpu.pipeline_mode<synchronous>, transform_indices = @transform_1, window_bounds = array<i64: 8, 128>}]} {
    %c0 = arith.constant 0 : index
    %c0_0 = arith.constant 0 : index
    %0 = vector.load %arg1[%c0, %c0_0] : memref<8x128xf32, #tpu.memory_space<vmem>>, vector<8x128xf32>
    %cst = arith.constant 1.000000e+00 : f32
    %1 = vector.broadcast %cst : f32 to vector<8x128xf32>
    %2 = arith.addf %0, %1 : vector<8x128xf32>
    %c0_1 = arith.constant 0 : index
    %c0_2 = arith.constant 0 : index
    %3 = vector.load %arg2[%c0_1, %c0_2] : memref<8x128xf32, #tpu.memory_space<vmem>>, vector<8x128xf32>
    tpu.vector_store %arg2[%c0_1, %c0_2], %2 {strides = array<i32>} : memref<8x128xf32, #tpu.memory_space<vmem>>, vector<8x128xf32>,
    return
  }
  func.func @transform_0(%arg0: i32) -> (i32, i32) {
    %c0_i32 = arith.constant 0 : i32
    %c0_i32_0 = arith.constant 0 : i32
    %c0_i32_1 = arith.constant 0 : i32
    return %c0_i32, %c0_i32_0 : i32, i32
  }
  func.func @transform_1(%arg0: i32) -> (i32, i32) {
    %c0_i32 = arith.constant 0 : i32
    %c0_i32_0 = arith.constant 0 : i32
    %c0_i32_1 = arith.constant 0 : i32
    return %c0_i32, %c0_i32_0 : i32, i32
  }
}

module attributes {stable_mosaic.version = 11 : i64} {
  func.func @_qkv_proj_kernel(%arg0: i32, %arg1: i32, %arg2: memref<1x8x64xf32, #tpu.memory_space<vmem>>, %arg3: memref<64x192xf32, #tpu.memory_space<vmem>>, %arg4: memref<1x8x64xf32, #tpu.memory_space<vmem>>, %arg5: memref<1x8x64xf32, #tpu.memory_space<vmem>>, %arg6: memref<1x8x64xf32, #tpu.memory_space<vmem>>) attributes {dimension_semantics = [#tpu.dimension_semantics<parallel>, #tpu.dimension_semantics<parallel>], iteration_bounds = array<i64: 2, 1>, scalar_prefetch = 0 : i64, scratch_operands = 0 : i64, tpu.core_type = #tpu.core_type<tc>, window_params = [{transform_indices = @transform_0, window_bounds = array<i64: 1, 8, 64>}, {pipeline_mode = #tpu.pipeline_mode<synchronous>, transform_indices = @transform_1, window_bounds = array<i64: 64, 192>}, {transform_indices = @transform_2, window_bounds = array<i64: 1, 8, 64>}, {transform_indices = @transform_3, window_bounds = array<i64: 1, 8, 64>}, {transform_indices = @transform_4, window_bounds = array<i64: 1, 8, 64>}]} {
    %c0 = arith.constant 0 : index
    %c0_0 = arith.constant 0 : index
    %c0_1 = arith.constant 0 : index
    %0 = vector.load %arg2[%c0, %c0_0, %c0_1] : memref<1x8x64xf32, #tpu.memory_space<vmem>>, vector<1x8x64xf32>
    %1 = vector.shape_cast %0 : vector<1x8x64xf32> to vector<8x64xf32>
    %c0_2 = arith.constant 0 : index
    %c0_3 = arith.constant 0 : index
    %2 = vector.load %arg3[%c0_2, %c0_3] : memref<64x192xf32, #tpu.memory_space<vmem>>, vector<64x192xf32>
    %cst = arith.constant dense<0.000000e+00> : vector<8x192xf32>
    %3 = tpu.matmul %1, %2, %cst {dimension_numbers = #tpu.dot_dimension_numbers<[1], [0], [0], [1], [0, 0, 1, 1], [], []>} : vector<8x64xf32>, vector<64x192xf32>, vector<8x192xf32> -> vector<8x192xf32>
    %4 = vector.extract_strided_slice %3 {offsets = [0, 0], sizes = [8, 64], strides = [1, 1]} : vector<8x192xf32> to vector<8x64xf32>
    %c0_4 = arith.constant 0 : index
    %c0_5 = arith.constant 0 : index
    %c0_6 = arith.constant 0 : index
    %5 = vector.load %arg4[%c0_4, %c0_5, %c0_6] : memref<1x8x64xf32, #tpu.memory_space<vmem>>, vector<1x8x64xf32>
    %6 = vector.shape_cast %5 : vector<1x8x64xf32> to vector<8x64xf32>
    %7 = vector.shape_cast %4 : vector<8x64xf32> to vector<1x8x64xf32>
    tpu.vector_store %arg4[%c0_4, %c0_5, %c0_6], %7 {strides = array<i32>} : memref<1x8x64xf32, #tpu.memory_space<vmem>>, vector<1x8x64xf32>,
    %8 = vector.extract_strided_slice %3 {offsets = [0, 64], sizes = [8, 64], strides = [1, 1]} : vector<8x192xf32> to vector<8x64xf32>
    %c0_7 = arith.constant 0 : index
    %c0_8 = arith.constant 0 : index
    %c0_9 = arith.constant 0 : index
    %9 = vector.load %arg5[%c0_7, %c0_8, %c0_9] : memref<1x8x64xf32, #tpu.memory_space<vmem>>, vector<1x8x64xf32>
    %10 = vector.shape_cast %9 : vector<1x8x64xf32> to vector<8x64xf32>
    %11 = vector.shape_cast %8 : vector<8x64xf32> to vector<1x8x64xf32>
    tpu.vector_store %arg5[%c0_7, %c0_8, %c0_9], %11 {strides = array<i32>} : memref<1x8x64xf32, #tpu.memory_space<vmem>>, vector<1x8x64xf32>,
    %12 = vector.extract_strided_slice %3 {offsets = [0, 128], sizes = [8, 64], strides = [1, 1]} : vector<8x192xf32> to vector<8x64xf32>
    %c0_10 = arith.constant 0 : index
    %c0_11 = arith.constant 0 : index
    %c0_12 = arith.constant 0 : index
    %13 = vector.load %arg6[%c0_10, %c0_11, %c0_12] : memref<1x8x64xf32, #tpu.memory_space<vmem>>, vector<1x8x64xf32>
    %14 = vector.shape_cast %13 : vector<1x8x64xf32> to vector<8x64xf32>
    %15 = vector.shape_cast %12 : vector<8x64xf32> to vector<1x8x64xf32>
    tpu.vector_store %arg6[%c0_10, %c0_11, %c0_12], %15 {strides = array<i32>} : memref<1x8x64xf32, #tpu.memory_space<vmem>>, vector<1x8x64xf32>,
    return
  }
  func.func @transform_0(%arg0: i32, %arg1: i32) -> (i32, i32, i32) {
    %c0_i32 = arith.constant 0 : i32
    %c0_i32_0 = arith.constant 0 : i32
    return %arg0, %arg1, %c0_i32 : i32, i32, i32
  }
  func.func @transform_1(%arg0: i32, %arg1: i32) -> (i32, i32) {
    %c0_i32 = arith.constant 0 : i32
    %c0_i32_0 = arith.constant 0 : i32
    %c0_i32_1 = arith.constant 0 : i32
    return %c0_i32, %c0_i32_0 : i32, i32
  }
  func.func @transform_2(%arg0: i32, %arg1: i32) -> (i32, i32, i32) {
    %c0_i32 = arith.constant 0 : i32
    %c0_i32_0 = arith.constant 0 : i32
    return %arg0, %arg1, %c0_i32 : i32, i32, i32
  }
  func.func @transform_3(%arg0: i32, %arg1: i32) -> (i32, i32, i32) {
    %c0_i32 = arith.constant 0 : i32
    %c0_i32_0 = arith.constant 0 : i32
    return %arg0, %arg1, %c0_i32 : i32, i32, i32
  }
  func.func @transform_4(%arg0: i32, %arg1: i32) -> (i32, i32, i32) {
    %c0_i32 = arith.constant 0 : i32
    %c0_i32_0 = arith.constant 0 : i32
    return %arg0, %arg1, %c0_i32 : i32, i32, i32
  }
}

</mosaic_0001>

<llo_original>
// kernel: tpu_custom_call.1
$region0: #{tpu_custom_call.1}
  #allocation0 [shape = 'u32[]', space=smem, size = 0x4, offset = 0x4, fixed_abs, tag = 'smem constant byte address 0x4 - core index']
  #allocation1 [shape = 'u32[72,128]{1,0:T(1,128)}', space=vmem, size = 0x9000, scoped, tag = 'internal scratch']
  %s0 = inlined_call_operand.hbm [shape: f32[8,128], index: 0, kind: input, shape index: {}]
  %s1 = inlined_call_operand.hbm [shape: f32[8,128], index: 1, kind: output, shape index: {}]
  %s2 = sld [smem:[#allocation0]]
  $region18: #{tpu_custom_call.1} parent=0
    _
  %s4 = ssub.s32 1, %s2
  %s5 = scalar_select 0, %s4, %s2
  $region1: #{tpu_custom_call.1} parent=0
    #allocation2 [shape = 'u8[4096]{0}', space=vmem, size = 0x1000, scoped, tag = 'input window, operand 0, single buffered']
    #allocation3 [shape = 's32[1]{0}', space=sflag, size = 0x4, scoped, tag = 'scoped memory for tpu_custom_call.1']
    #allocation4 [shape = 's32[1]{0}', space=sflag, size = 0x4, scoped, tag = 'scoped memory for tpu_custom_call.1']
    #allocation5 [shape = 'u8[4096]{0}', space=vmem, size = 0x1000, scoped, tag = 'output window, operand 0, single buffered']
    %6 = vsyncpa [#allocation3], 0
    %7 = vsyncpa [#allocation4], 0
    // Predicated region
    $region2: #{tpu_custom_call.1} parent=1 // pred_check
      _
    $region3: #{tpu_custom_call.1} parent=1 // pred_check_branch
      %9 = sbr.rel (0) target = $region5
    $region4: #{tpu_custom_call.1} parent=1 // pred_region
      %11 = vsyncadd [#allocation3], 0
      %s13 = sshll.u32 %s0, 4
      %s14 = int_to_ptr.hbm [resolvable:$true] %s13
      %s15 = sshll.u32 [#allocation2], 4
      %s16 = int_to_ptr.vmem [resolvable:$true] %s15
      %18 = dma.hbm_to_vmem [thread:$0]  %s14, 128, %s16, [#allocation3]
    $region5: #{tpu_custom_call.1} parent=1 // pred_fallthru
      _
    // Predicated region
    $region6: #{tpu_custom_call.1} parent=1 // pred_check
      _
    $region7: #{tpu_custom_call.1} parent=1 // pred_check_branch
      %20 = sbr.rel (0) target = $region9
    $region8: #{tpu_custom_call.1} parent=1 // pred_region
      %22 = dma.done [#allocation3], 128
    $region9: #{tpu_custom_call.1} parent=1 // pred_fallthru
      _
    %v23 = vld [vmem:[#allocation2] sm:$0xff]
    %v24 = vadd.f32 %v23, 1.0
    %25 = vst [vmem:[#allocation5] sm:$0xff] %v24
    // Predicated region
    $region10: #{tpu_custom_call.1} parent=1 // pred_check
      _
    $region11: #{tpu_custom_call.1} parent=1 // pred_check_branch
      %27 = sbr.rel (0) target = $region13
    $region12: #{tpu_custom_call.1} parent=1 // pred_region
      %29 = vsyncadd [#allocation4], 0
      %s31 = sshll.u32 [#allocation5], 4
      %s32 = int_to_ptr.vmem [resolvable:$true] %s31
      %s33 = sshll.u32 %s1, 4
      %s34 = int_to_ptr.hbm [resolvable:$true] %s33
      %36 = dma.vmem_to_hbm [thread:$0]  %s32, 128, %s34, [#allocation4]
    $region13: #{tpu_custom_call.1} parent=1 // pred_fallthru
      _
    // Predicated region
    $region14: #{tpu_custom_call.1} parent=1 // pred_check
      _
    $region15: #{tpu_custom_call.1} parent=1 // pred_check_branch
      %38 = sbr.rel (0) target = $region17
    $region16: #{tpu_custom_call.1} parent=1 // pred_region
      %40 = dma.done [#allocation4], 128
    $region17: #{tpu_custom_call.1} parent=1 // pred_fallthru
      _
    %41 = vsyncpa [#allocation3], 1
    %42 = vsyncpa [#allocation4], 1

// kernel: tpu_custom_call.1
$region0: #{tpu_custom_call.1}
  #allocation0 [shape = 'u32[]', space=smem, size = 0x4, offset = 0x4, fixed_abs, tag = 'smem constant byte address 0x4 - core index']
  #allocation1 [shape = 'u32[72,128]{1,0:T(1,128)}', space=vmem, size = 0x9000, scoped, tag = 'internal scratch']
  %s0 = inlined_call_operand.hbm [shape: f32[2,8,64], index: 0, kind: input, shape index: {}]
  %s1 = inlined_call_operand.hbm [shape: f32[64,192], index: 1, kind: input, shape index: {}]
  %s2 = inlined_call_operand.hbm [shape: f32[2,8,64], index: 2, kind: output, shape index: {0}]
  %s3 = inlined_call_operand.hbm [shape: f32[2,8,64], index: 3, kind: output, shape index: {1}]
  %s4 = inlined_call_operand.hbm [shape: f32[2,8,64], index: 4, kind: output, shape index: {2}]
  %5 = xla_tuple %s2, %s3, %s4
  %s6 = sld [smem:[#allocation0]]
  $region65: #{tpu_custom_call.1} parent=0
    _
  %s8 = ssub.s32 1, %s6
  %s9 = scalar_select 0, %s8, %s6
  $region1: #{tpu_custom_call.1} parent=0
    #allocation2 [shape = 'u8[8192]{0}', space=vmem, size = 0x2000, scoped, tag = 'input window, operand 0']
    #allocation3 [shape = 's32[2]{0}', space=sflag, size = 0x8, scoped, tag = 'scoped memory for tpu_custom_call.1']
    #allocation4 [shape = 's32[2]{0}', space=sflag, size = 0x8, scoped, tag = 'scoped memory for tpu_custom_call.1']
    #allocation5 [shape = 'u8[65536]{0}', space=vmem, size = 0x10000, scoped, tag = 'input window, operand 1, single buffered']
    #allocation6 [shape = 's32[1]{0}', space=sflag, size = 0x4, scoped, tag = 'scoped memory for tpu_custom_call.1']
    #allocation7 [shape = 'u8[8192]{0}', space=vmem, size = 0x2000, scoped, tag = 'output window, operand 0']
    #allocation8 [shape = 'u8[8192]{0}', space=vmem, size = 0x2000, scoped, tag = 'output window, operand 1']
    #allocation9 [shape = 's32[2]{0}', space=sflag, size = 0x8, scoped, tag = 'scoped memory for tpu_custom_call.1']
    #allocation10 [shape = 'u8[8192]{0}', space=vmem, size = 0x2000, scoped, tag = 'output window, operand 2']
    %10 = vsyncpa [#allocation3], 0
    %s11 = scalar_lea.sflag [#allocation3], 1
    %12 = vsyncpa %s11, 0
    %13 = vsyncpa [#allocation6], 0
    %14 = vsyncpa [#allocation4], 0
    %s15 = scalar_lea.sflag [#allocation4], 1
    %16 = vsyncpa %s15, 0
    %17 = vsyncpa [#allocation9], 0
    %s18 = scalar_lea.sflag [#allocation9], 1
    %19 = vsyncpa %s18, 0
    loop: start=0, step=1, limit=4
    $region2: #{tpu_custom_call.1} parent=1 // loop_pre_header
      _
    $region3: #{tpu_custom_call.1} parent=1 // loop_header
      %s21 = sphi 0, %s25
      %p22 = scmp.ge.s32.totalorder %s21, 4
      %s28 = sphi 0, %s40
      %s29 = sphi 0, %s36
      %s30 = sphi 0, %s28
      %s31 = sphi 0, %s29
      %s32 = sphi 0, %s30
      %s33 = sphi 0, %s31
      %s45 = sphi 0, %s47
      %s48 = sphi 0, %s45
      %s49 = sphi 0, %s48
      %s65 = sphi 0, %s49
      %s69 = sphi 0, %s69
      %s71 = sphi 0, %s69
      %s72 = sphi 0, %s71
      %s86 = sphi 0, %s72
      %s94 = sphi 0, %s96
      %s97 = sphi 0, %s94
      %s98 = sphi 0, %s97
      %s114 = sphi 0, %s98
      %s122 = sphi 0, %s124
      %s125 = sphi 0, %s122
      %s126 = sphi 0, %s125
      %s142 = sphi 0, %s126
      %s150 = sphi 0, %s152
      %s153 = sphi 0, %s150
      %s154 = sphi 0, %s153
      %s170 = sphi 0, %s154
    $region4: #{tpu_custom_call.1} parent=1 // loop_header_branch
      %24 = sbr.rel (%p22) target = $region8
    $region5: #{tpu_custom_call.1} parent=1 // loop_body
      %s26 = ssub.s32 %s21, 1
      %s27 = ssub.s32 %s21, 2
      %s34 = sadd.s32 1, %s29
      %p35 = scmp.ge.s32.totalorder %s34, 1
      %s36 = scalar_select %p35, 0, %s34
      %s37 = sadd.s32 1, %s28
      %s38 = scalar_select %p35, %s37, %s28
      %p39 = scmp.ge.s32.totalorder %s38, 2
      %s40 = scalar_select %p39, 0, %s38
      %s41 = ssub.s32 %s28, %s40
      %s42 = ssub.s32 %s29, %s36
      %s43 = sor.u32 %s41, %s42
      %p44 = scmp.eq.s32.totalorder %s43, 0
      %s46 = sadd.s32 %s45, 1
      %s47 = scalar_select %p44, %s45, %s46
      %p50 = pneg %p44
      %p51 = scmp.eq.s32.totalorder %s21, 1
      %p52 = por %p50, %p51
      %p53 = scmp.ne.s32.totalorder %s45, %s48
      %p54 = scmp.eq.s32.totalorder %s21, 0
      %p55 = por %p53, %p54
      %p56 = scmp.ne.s32.totalorder %s45, %s48
      %p57 = scmp.eq.s32.totalorder %s26, 1
      %p58 = por %p56, %p57
      %p59 = scmp.ne.s32.totalorder %s48, %s49
      %p60 = scmp.eq.s32.totalorder %s26, 0
      %p61 = por %p59, %p60
      %p62 = scmp.ne.s32.totalorder %s48, %s49
      %p63 = scmp.eq.s32.totalorder %s27, 1
      %p64 = por %p62, %p63
      %p66 = scmp.ne.s32.totalorder %s49, %s65
      %p67 = scmp.eq.s32.totalorder %s27, 0
      %p68 = por %p66, %p67
      %s70 = sadd.s32 %s69, 1
      %p73 = scmp.eq.s32.totalorder %s21, 1
      %p74 = scmp.ne.s32.totalorder %s69, %s71
      %p75 = scmp.eq.s32.totalorder %s21, 0
      %p76 = por %p74, %p75
      %p77 = scmp.ne.s32.totalorder %s69, %s71
      %p78 = scmp.eq.s32.totalorder %s26, 1
      %p79 = por %p77, %p78
      %p80 = scmp.ne.s32.totalorder %s71, %s72
      %p81 = scmp.eq.s32.totalorder %s26, 0
      %p82 = por %p80, %p81
      %p83 = scmp.ne.s32.totalorder %s71, %s72
      %p84 = scmp.eq.s32.totalorder %s27, 1
      %p85 = por %p83, %p84
      %p87 = scmp.ne.s32.totalorder %s72, %s86
      %p88 = scmp.eq.s32.totalorder %s27, 0
      %p89 = por %p87, %p88
      %s90 = ssub.s32 %s28, %s40
      %s91 = ssub.s32 %s29, %s36
      %s92 = sor.u32 %s90, %s91
      %p93 = scmp.eq.s32.totalorder %s92, 0
      %s95 = sadd.s32 %s94, 1
      %s96 = scalar_select %p93, %s94, %s95
      %p99 = pneg %p93
      %p100 = scmp.eq.s32.totalorder %s21, 1
      %p101 = por %p99, %p100
      %p102 = scmp.ne.s32.totalorder %s94, %s97
      %p103 = scmp.eq.s32.totalorder %s21, 0
      %p104 = por %p102, %p103
      %p105 = scmp.ne.s32.totalorder %s94, %s97
      %p106 = scmp.eq.s32.totalorder %s26, 1
      %p107 = por %p105, %p106
      %p108 = scmp.ne.s32.totalorder %s97, %s98
      %p109 = scmp.eq.s32.totalorder %s26, 0
      %p110 = por %p108, %p109
      %p111 = scmp.ne.s32.totalorder %s97, %s98
      %p112 = scmp.eq.s32.totalorder %s27, 1
      %p113 = por %p111, %p112
      %p115 = scmp.ne.s32.totalorder %s98, %s114
      %p116 = scmp.eq.s32.totalorder %s27, 0
      %p117 = por %p115, %p116
      %s118 = ssub.s32 %s28, %s40
      %s119 = ssub.s32 %s29, %s36
      %s120 = sor.u32 %s118, %s119
      %p121 = scmp.eq.s32.totalorder %s120, 0
      %s123 = sadd.s32 %s122, 1
      %s124 = scalar_select %p121, %s122, %s123
      %p127 = pneg %p121
      %p128 = scmp.eq.s32.totalorder %s21, 1
      %p129 = por %p127, %p128
      %p130 = scmp.ne.s32.totalorder %s122, %s125
      %p131 = scmp.eq.s32.totalorder %s21, 0
      %p132 = por %p130, %p131
      %p133 = scmp.ne.s32.totalorder %s122, %s125
      %p134 = scmp.eq.s32.totalorder %s26, 1
      %p135 = por %p133, %p134
      %p136 = scmp.ne.s32.totalorder %s125, %s126
      %p137 = scmp.eq.s32.totalorder %s26, 0
      %p138 = por %p136, %p137
      %p139 = scmp.ne.s32.totalorder %s125, %s126
      %p140 = scmp.eq.s32.totalorder %s27, 1
      %p141 = por %p139, %p140
      %p143 = scmp.ne.s32.totalorder %s126, %s142
      %p144 = scmp.eq.s32.totalorder %s27, 0
      %p145 = por %p143, %p144
      %s146 = ssub.s32 %s28, %s40
      %s147 = ssub.s32 %s29, %s36
      %s148 = sor.u32 %s146, %s147
      %p149 = scmp.eq.s32.totalorder %s148, 0
      %s151 = sadd.s32 %s150, 1
      %s152 = scalar_select %p149, %s150, %s151
      %p155 = pneg %p149
      %p156 = scmp.eq.s32.totalorder %s21, 1
      %p157 = por %p155, %p156
      %p158 = scmp.ne.s32.totalorder %s150, %s153
      %p159 = scmp.eq.s32.totalorder %s21, 0
      %p160 = por %p158, %p159
      %p161 = scmp.ne.s32.totalorder %s150, %s153
      %p162 = scmp.eq.s32.totalorder %s26, 1
      %p163 = por %p161, %p162
      %p164 = scmp.ne.s32.totalorder %s153, %s154
      %p165 = scmp.eq.s32.totalorder %s26, 0
      %p166 = por %p164, %p165
      %p167 = scmp.ne.s32.totalorder %s153, %s154
      %p168 = scmp.eq.s32.totalorder %s27, 1
      %p169 = por %p167, %p168
      %p171 = scmp.ne.s32.totalorder %s154, %s170
      %p172 = scmp.eq.s32.totalorder %s27, 0
      %p173 = por %p171, %p172
      %p174 = scmp.le.s32.totalorder 1, %s21
      %p175 = scmp.lt.s32.totalorder %s21, 3
      %p176 = pnand %p174, %p175
      %p177 = pneg %p176
      // Predicated region
      $region9: #{tpu_custom_call.1} parent=5 // pred_check
        _
      $region10: #{tpu_custom_call.1} parent=5 // pred_check_branch
        %179 = sbr.rel (%p176) target = $region12
      $region11: #{tpu_custom_call.1} parent=5 // pred_region
        %s180 = ssub.s32 %s21, 1
        // Predicated region
        $region13: #{tpu_custom_call.1} parent=11 // pred_check
          %p181 = pneg %p82
        $region14: #{tpu_custom_call.1} parent=11 // pred_check_branch
          %183 = sbr.rel (%p181) target = $region16
        $region15: #{tpu_custom_call.1} parent=11 // pred_region
          %185 = vsyncadd [#allocation6], 0
          %s186 = sshll.u32 %s1, 4
          %s187 = int_to_ptr.hbm [resolvable:$true] %s186
          %s188 = sshll.u32 [#allocation5], 4
          %s189 = int_to_ptr.vmem [resolvable:$true] %s188
          %194 = dma.hbm_to_vmem [thread:$0]  %s187, 2048, %s189, [#allocation6], 256, 256, 16
        $region16: #{tpu_custom_call.1} parent=11 // pred_fallthru
          _
      $region12: #{tpu_custom_call.1} parent=5 // pred_fallthru
        _
      %p195 = scmp.lt.s32.totalorder %s21, 2
      // Predicated region
      $region17: #{tpu_custom_call.1} parent=5 // pred_check
        %p196 = pneg %p195
      $region18: #{tpu_custom_call.1} parent=5 // pred_check_branch
        %198 = sbr.rel (%p196) target = $region20
      $region19: #{tpu_custom_call.1} parent=5 // pred_region
        // Predicated region
        $region21: #{tpu_custom_call.1} parent=19 // pred_check
          %p199 = pneg %p55
        $region22: #{tpu_custom_call.1} parent=19 // pred_check_branch
          %201 = sbr.rel (%p199) target = $region24
        $region23: #{tpu_custom_call.1} parent=19 // pred_region
          %s202 = sand.u32 %s45, 1
          %s203 = scalar_lea.sflag [#allocation3], %s202
          %s204 = sand.u32 %s45, 1
          %s205 = smul.addr %s204, 8
          %s206 = scalar_lea.vmem [#allocation2], %s205
          %208 = vsyncadd %s203, 0
          %s209 = sadd.s32 %s29, %s28
          %s210 = smul.addr %s209, 8
          %s211 = scalar_lea.hbm %s0, %s210
          %s213 = sshll.u32 %s211, 4
          %s214 = int_to_ptr.hbm [resolvable:$true] %s213
          %s215 = sshll.u32 %s206, 4
          %s216 = int_to_ptr.vmem [resolvable:$true] %s215
          %218 = dma.hbm_to_vmem [thread:$0]  %s214, 128, %s216, %s203
        $region24: #{tpu_custom_call.1} parent=19 // pred_fallthru
          _
      $region20: #{tpu_custom_call.1} parent=5 // pred_fallthru
        _
      %p219 = scmp.le.s32.totalorder 1, %s21
      %p220 = scmp.lt.s32.totalorder %s21, 3
      %p221 = pnand %p219, %p220
      %p222 = pneg %p221
      // Predicated region
      $region25: #{tpu_custom_call.1} parent=5 // pred_check
        _
      $region26: #{tpu_custom_call.1} parent=5 // pred_check_branch
        %224 = sbr.rel (%p221) target = $region28
      $region27: #{tpu_custom_call.1} parent=5 // pred_region
        %s225 = ssub.s32 %s21, 1
        %s226 = sand.u32 %s48, 1
        %s227 = scalar_lea.sflag [#allocation3], %s226
        %s228 = sand.u32 %s48, 1
        %s229 = smul.addr %s228, 8
        %s230 = scalar_lea.vmem [#allocation2], %s229
        // Predicated region
        $region29: #{tpu_custom_call.1} parent=27 // pred_check
          %p231 = pneg %p61
        $region30: #{tpu_custom_call.1} parent=27 // pred_check_branch
          %233 = sbr.rel (%p231) target = $region32
        $region31: #{tpu_custom_call.1} parent=27 // pred_region
          %235 = dma.done %s227, 128
        $region32: #{tpu_custom_call.1} parent=27 // pred_fallthru
          _
        // Predicated region
        $region33: #{tpu_custom_call.1} parent=27 // pred_check
          %p236 = pneg %p82
        $region34: #{tpu_custom_call.1} parent=27 // pred_check_branch
          %238 = sbr.rel (%p236) target = $region36
        $region35: #{tpu_custom_call.1} parent=27 // pred_region
          %240 = dma.done [#allocation6], 2048
        $region36: #{tpu_custom_call.1} parent=27 // pred_fallthru
          _
        %s241 = sand.u32 %s48, 1
        %s242 = scalar_lea.sflag [#allocation3], %s241
        %s243 = sand.u32 %s48, 1
        %s244 = smul.addr %s243, 8
        %s245 = scalar_lea.vmem [#allocation2], %s244
        %p246 = pneg %p61
        %p247 = pneg %p58
        %p248 = pneg %p82
        %p249 = pneg %p79
        %p250 = pneg %p110
        %p251 = pneg %p107
        %s252 = sand.u32 %s97, 1
        %s253 = scalar_lea.sflag [#allocation4], %s252
        %s254 = sand.u32 %s97, 1
        %s255 = smul.addr %s254, 8
        %s256 = scalar_lea.vmem [#allocation7], %s255
        %p257 = pneg %p138
        %p258 = pneg %p135
        %s259 = sand.u32 %s26, 1
        %s260 = scalar_lea.sflag [#allocation9], %s259
        %s261 = sand.u32 %s125, 1
        %s262 = smul.addr %s261, 8
        %s263 = scalar_lea.vmem [#allocation8], %s262
        %p264 = pneg %p166
        %p265 = pneg %p163
        %s266 = sand.u32 %s26, 1
        %s267 = scalar_lea.sflag [#allocation9], %s266
        %s268 = sand.u32 %s153, 1
        %s269 = smul.addr %s268, 8
        %s270 = scalar_lea.vmem [#allocation10], %s269
        %v271 = vld [vmem:[%s230] sm:$0xff]
        %v272 = vld [vmem:[#allocation5] sm:$0xff]
        %v273 = vld [vmem:[#allocation5 + $0x8] sm:$0xff]
        %v274 = vld [vmem:[#allocation5 + $0x10] sm:$0xff]
        %v275 = vld [vmem:[#allocation5 + $0x18] sm:$0xff]
        %v276 = vld [vmem:[#allocation5 + $0x20] sm:$0xff]
        %v277 = vld [vmem:[#allocation5 + $0x28] sm:$0xff]
        %v278 = vld [vmem:[#allocation5 + $0x30] sm:$0xff]
        %v279 = vld [vmem:[#allocation5 + $0x38] sm:$0xff]
        %v280 = vld [vmem:[#allocation5 + $0x40] sm:$0xff]
        %v281 = vld [vmem:[#allocation5 + $0x48] sm:$0xff]
        %v282 = vld [vmem:[#allocation5 + $0x50] sm:$0xff]
        %v283 = vld [vmem:[#allocation5 + $0x58] sm:$0xff]
        %v284 = vld [vmem:[#allocation5 + $0x60] sm:$0xff]
        %v285 = vld [vmem:[#allocation5 + $0x68] sm:$0xff]
        %v286 = vld [vmem:[#allocation5 + $0x70] sm:$0xff]
        %v287 = vld [vmem:[#allocation5 + $0x78] sm:$0xff]
        %vm288 = vcmask 523264
        %v290 = vsel %vm288, %v271, 0
        %292 = vmatpush.msra.mxu0 0.0
        %293 = vmatpush.msra.mxu0 0.0
        %294 = vmatpush.msra.mxu0 0.0
        %295 = vmatpush.msra.mxu0 0.0
        %296 = vmatpush.msra.mxu0 0.0
        %297 = vmatpush.msra.mxu0 0.0
        %298 = vmatpush.msra.mxu0 0.0
        %299 = vmatpush.msra.mxu0 0.0
        %300 = vmatpush.msra.mxu0 %v286
        %301 = vmatpush.msra.mxu0 %v284
        %302 = vmatpush.msra.mxu0 %v282
        %303 = vmatpush.msra.mxu0 %v280
        %304 = vmatpush.msra.mxu0 %v278
        %305 = vmatpush.msra.mxu0 %v276
        %306 = vmatpush.msra.mxu0 %v274
        %307 = vmatpush.msra.mxu0 %v272
        %308 = vmatmul.f32.gmra.mxu0 %v290
        %v309 = vpop.f32.mrf.mxu0
        %v310 = vadd.f32 0.0, %v309
        %311 = vdwg.mxu0
        %312 = vmatpush.msra.mxu0 0.0
        %313 = vmatpush.msra.mxu0 0.0
        %314 = vmatpush.msra.mxu0 0.0
        %315 = vmatpush.msra.mxu0 0.0
        %316 = vmatpush.msra.mxu0 0.0
        %317 = vmatpush.msra.mxu0 0.0
        %318 = vmatpush.msra.mxu0 0.0
        %319 = vmatpush.msra.mxu0 0.0
        %320 = vmatpush.msra.mxu0 %v287
        %321 = vmatpush.msra.mxu0 %v285
        %322 = vmatpush.msra.mxu0 %v283
        %323 = vmatpush.msra.mxu0 %v281
        %324 = vmatpush.msra.mxu0 %v279
        %325 = vmatpush.msra.mxu0 %v277
        %326 = vmatpush.msra.mxu0 %v275
        %327 = vmatpush.msra.mxu0 %v273
        %328 = vmatmul.f32.gmra.mxu0 %v290
        %v329 = vpop.f32.mrf.mxu0
        %v330 = vadd.f32 0.0, %v329
        %331 = vdwg.mxu0
        %332 = vst.msk [vmem:[%s256] sm:$0xff] %vm288, %v310
        %334 = vrot.lane.b32.xlu0 %v310, 64
        %v335 = vpop.permute.xlu0 %334
        %337 = vst.msk [vmem:[%s263] sm:$0xff] %vm288, %v335
        %338 = vst.msk [vmem:[%s270] sm:$0xff] %vm288, %v330
        %s339 = sand.u32 %s97, 1
        %s340 = scalar_lea.sflag [#allocation4], %s339
        %s341 = sand.u32 %s97, 1
        %s342 = smul.addr %s341, 8
        %s343 = scalar_lea.vmem [#allocation7], %s342
        %s344 = sand.u32 %s26, 1
        %s345 = scalar_lea.sflag [#allocation9], %s344
        %s346 = sand.u32 %s125, 1
        %s347 = smul.addr %s346, 8
        %s348 = scalar_lea.vmem [#allocation8], %s347
        %s349 = sand.u32 %s26, 1
        %s350 = scalar_lea.sflag [#allocation9], %s349
        %s351 = sand.u32 %s153, 1
        %s352 = smul.addr %s351, 8
        %s353 = scalar_lea.vmem [#allocation10], %s352
        // Predicated region
        $region37: #{tpu_custom_call.1} parent=27 // pred_check
          %p354 = pneg %p107
        $region38: #{tpu_custom_call.1} parent=27 // pred_check_branch
          %356 = sbr.rel (%p354) target = $region40
        $region39: #{tpu_custom_call.1} parent=27 // pred_region
          %358 = vsyncadd %s340, 0
          %s359 = sadd.s32 %s31, %s30
          %s360 = smul.addr %s359, 8
          %s361 = scalar_lea.hbm %s2, %s360
          %s363 = sshll.u32 %s343, 4
          %s364 = int_to_ptr.vmem [resolvable:$true] %s363
          %s365 = sshll.u32 %s361, 4
          %s366 = int_to_ptr.hbm [resolvable:$true] %s365
          %368 = dma.vmem_to_hbm [thread:$0]  %s364, 128, %s366, %s340
        $region40: #{tpu_custom_call.1} parent=27 // pred_fallthru
          _
        // Predicated region
        $region41: #{tpu_custom_call.1} parent=27 // pred_check
          %p369 = pneg %p135
        $region42: #{tpu_custom_call.1} parent=27 // pred_check_branch
          %371 = sbr.rel (%p369) target = $region44
        $region43: #{tpu_custom_call.1} parent=27 // pred_region
          %373 = vsyncadd %s345, 0
          %s374 = sadd.s32 %s31, %s30
          %s375 = smul.addr %s374, 8
          %s376 = scalar_lea.hbm %s3, %s375
          %s378 = sshll.u32 %s348, 4
          %s379 = int_to_ptr.vmem [resolvable:$true] %s378
          %s380 = sshll.u32 %s376, 4
          %s381 = int_to_ptr.hbm [resolvable:$true] %s380
          %383 = dma.vmem_to_hbm [thread:$0]  %s379, 128, %s381, %s345
        $region44: #{tpu_custom_call.1} parent=27 // pred_fallthru
          _
        // Predicated region
        $region45: #{tpu_custom_call.1} parent=27 // pred_check
          %p384 = pneg %p163
        $region46: #{tpu_custom_call.1} parent=27 // pred_check_branch
          %386 = sbr.rel (%p384) target = $region48
        $region47: #{tpu_custom_call.1} parent=27 // pred_region
          %388 = vsyncadd %s350, 0
          %s389 = sadd.s32 %s31, %s30
          %s390 = smul.addr %s389, 8
          %s391 = scalar_lea.hbm %s4, %s390
          %s393 = sshll.u32 %s353, 4
          %s394 = int_to_ptr.vmem [resolvable:$true] %s393
          %s395 = sshll.u32 %s391, 4
          %s396 = int_to_ptr.hbm [resolvable:$true] %s395
          %398 = dma.vmem_to_hbm [thread:$0]  %s394, 128, %s396, %s350
        $region48: #{tpu_custom_call.1} parent=27 // pred_fallthru
          _
      $region28: #{tpu_custom_call.1} parent=5 // pred_fallthru
        _
      %p399 = scmp.le.s32.totalorder 2, %s21
      // Predicated region
      $region49: #{tpu_custom_call.1} parent=5 // pred_check
        %p400 = pneg %p399
      $region50: #{tpu_custom_call.1} parent=5 // pred_check_branch
        %402 = sbr.rel (%p400) target = $region52
      $region51: #{tpu_custom_call.1} parent=5 // pred_region
        %s403 = ssub.s32 %s21, 2
        // Predicated region
        $region53: #{tpu_custom_call.1} parent=51 // pred_check
          %p404 = pneg %p113
        $region54: #{tpu_custom_call.1} parent=51 // pred_check_branch
          %406 = sbr.rel (%p404) target = $region56
        $region55: #{tpu_custom_call.1} parent=51 // pred_region
          %s407 = sand.u32 %s98, 1
          %s408 = scalar_lea.sflag [#allocation4], %s407
          %s409 = sand.u32 %s98, 1
          %s410 = smul.addr %s409, 8
          %s411 = scalar_lea.vmem [#allocation7], %s410
          %413 = dma.done %s408, 128
        $region56: #{tpu_custom_call.1} parent=51 // pred_fallthru
          _
        // Predicated region
        $region57: #{tpu_custom_call.1} parent=51 // pred_check
          %p414 = pneg %p141
        $region58: #{tpu_custom_call.1} parent=51 // pred_check_branch
          %416 = sbr.rel (%p414) target = $region60
        $region59: #{tpu_custom_call.1} parent=51 // pred_region
          %s417 = sand.u32 %s27, 1
          %s418 = scalar_lea.sflag [#allocation9], %s417
          %s419 = sand.u32 %s126, 1
          %s420 = smul.addr %s419, 8
          %s421 = scalar_lea.vmem [#allocation8], %s420
          %423 = dma.done %s418, 128
        $region60: #{tpu_custom_call.1} parent=51 // pred_fallthru
          _
        // Predicated region
        $region61: #{tpu_custom_call.1} parent=51 // pred_check
          %p424 = pneg %p169
        $region62: #{tpu_custom_call.1} parent=51 // pred_check_branch
          %426 = sbr.rel (%p424) target = $region64
        $region63: #{tpu_custom_call.1} parent=51 // pred_region
          %s427 = sand.u32 %s27, 1
          %s428 = scalar_lea.sflag [#allocation9], %s427
          %s429 = sand.u32 %s154, 1
          %s430 = smul.addr %s429, 8
          %s431 = scalar_lea.vmem [#allocation10], %s430
          %433 = dma.done %s428, 128
        $region64: #{tpu_custom_call.1} parent=51 // pred_fallthru
          _
      $region52: #{tpu_custom_call.1} parent=5 // pred_fallthru
        _
    $region6: #{tpu_custom_call.1} parent=1 // loop_footer
      %s25 = sadd.s32 1, %s21
    $region7: #{tpu_custom_call.1} parent=1 // loop_footer_branch
      %20 = sbr.rel target = $region3
    $region8: #{tpu_custom_call.1} parent=1 // loop_exit
      _
    %434 = vsyncpa [#allocation3], 1
    %s435 = scalar_lea.sflag [#allocation3], 1
    %436 = vsyncpa %s435, 1
    %437 = vsyncpa [#allocation6], 1
    %438 = vsyncpa [#allocation4], 1
    %s439 = scalar_lea.sflag [#allocation4], 1
    %440 = vsyncpa %s439, 1
    %441 = vsyncpa [#allocation9], 1
    %s442 = scalar_lea.sflag [#allocation9], 1
    %443 = vsyncpa %s442, 1

</llo_original>
